<compile_context>
chip_gen: v7x
topology: tpu7x:2x2x1
jax: 0.10.0
libtpu: 0.0.40
codegen_flags: <defaults>
</compile_context>

<pallas_src>
import functools
import math

import jax
import jax.numpy as jnp
from jax import lax
from jax.experimental import pallas as pl
from jax.experimental.pallas import tpu as pltpu


_VMEM_LIMIT = 48 * 1024 * 1024        # explicit budget: fits v5e/v6e (128 MiB phys) and v7x (64 MiB)
_TARGET_TILE_BYTES = 4 * 1024 * 1024  # per pipelined buffer (review: 2 MiB was v5e-sized)


# ----------------------------------------------------------------------------
# Tile sizing helpers
# ----------------------------------------------------------------------------
def _pick_rows(width, n_rows, target_bytes=_TARGET_TILE_BYTES):
    """Row-tile for the channels_last kernels: ~target_bytes per pipelined buffer."""
    lane_w = ((max(width, 128) + 127) // 128) * 128        # lanes pad to 128
    tm = max(8, (target_bytes // (lane_w * 4)) // 8 * 8)
    if n_rows >= 16:
        # keep >= 2 grid steps so megacore (v7x) chips split the work and the
        # auto-pipeline has something to overlap with.
        half = (((n_rows + 1) // 2) + 7) // 8 * 8
        tm = min(tm, half)
    return min(tm, n_rows)


def _pick_cfirst_tiles(b, c, s, target_bytes=_TARGET_TILE_BYTES):
    """(batch_tile, spatial_tile) for the channels_first kernel (lane axis = spatial)."""
    sub = ((c + 7) // 8) * 8                               # C axis pads to 8 sublanes
    ts_cap = max(128, (target_bytes // (sub * 4)) // 128 * 128)
    ts = s if s <= ts_cap else ts_cap
    ts_pad = ((ts + 127) // 128) * 128
    per_b = sub * ts_pad * 4                               # VMEM bytes one batch item adds
    want_bt = max(1, target_bytes // per_b)
    bt = 1
    for d in range(1, b + 1):                              # largest divisor of b <= want_bt
        if b % d == 0 and d <= want_bt:
            bt = d
    # keep >= 2 total grid steps when there is enough work (megacore / pipelining)
    if (b // bt) * pl.cdiv(s, ts) < 2:
        if bt > 1:
            for d in range(bt - 1, 0, -1):
                if b % d == 0:
                    bt = d
                    break
        elif s > 256:
            ts = (((s + 1) // 2) + 127) // 128 * 128
    return bt, ts


# ----------------------------------------------------------------------------
# channels_last kernels
# ----------------------------------------------------------------------------
def _ln_rows_folded_kernel(x_ref, m_ref, w_ref, b_ref, o_ref, *, eps):
    """Lane-folded block (TM, W): W/c segments per lane-row, segment stats via one
    resident block-diagonal averaging matrix on the otherwise-idle MXU."""
    x = x_ref[...].astype(jnp.float32)                     # (TM, W)
    m = m_ref[...]                                         # (W, W), hoisted + resident
    # Two independent MXU passes (no mean -> subtract -> square -> matmul chain).
    s1 = jnp.dot(x, m, preferred_element_type=jnp.float32)       # per-segment mean
    s2 = jnp.dot(x * x, m, preferred_element_type=jnp.float32)   # per-segment E[x^2]
    var = jnp.maximum(s2 - s1 * s1, 0.0)
    inv = lax.rsqrt(var + eps)
    y = (x - s1) * inv * w_ref[...] + b_ref[...]
    o_ref[...] = y.astype(o_ref.dtype)


def _ln_rows_plain_kernel(x_ref, w_ref, b_ref, o_ref, *, eps):
    """Un-folded block (TM, C): plain last-axis reduction (C already lane-dense)."""
    x = x_ref[...].astype(jnp.float32)                     # (TM, C)
    mean = jnp.mean(x, axis=-1, keepdims=True)
    xc = x - mean
    var = jnp.mean(xc * xc, axis=-1, keepdims=True)
    inv = lax.rsqrt(var + eps)
    y = xc * inv * w_ref[...] + b_ref[...]
    o_ref[...] = y.astype(o_ref.dtype)


def _layernorm_channels_last(x2d, weight, bias, eps, tm=None):
    """x2d: (N, C) normalized over axis -1 with affine (C,) params."""
    n, c = x2d.shape
    orig_dtype = x2d.dtype

    # Lane-fold g = 128/gcd(c,128) rows per folded row -> lane width multiple of 128
    # (lane-dense loads AND stores). Cap the folded width so the averaging matrix
    # stays small and the MXU pass stays cheap.
    g = 128 // math.gcd(c, 128)
    width = g * c
    folded = (g > 1) and (width <= 512)

    if folded:
        n_pad = ((n + g - 1) // g) * g
        if n_pad != n:
            # one cheap XLA pad (zeros are numerically safe) instead of a silent
            # fallback to the masked-store, lane-padded path.
            x2d = jnp.pad(x2d, ((0, n_pad - n), (0, 0)))
        nf = n_pad // g
        xf = x2d.reshape(nf, width)                        # free contiguous reshape
        wf = jnp.tile(weight.astype(jnp.float32), (g,)).reshape(1, width)
        bf = jnp.tile(bias.astype(jnp.float32), (g,)).reshape(1, width)
        # Block-diagonal averaging matrix, built ONCE (outside the kernel body).
        seg = jnp.arange(width, dtype=jnp.int32) // c
        mavg = (seg[:, None] == seg[None, :]).astype(jnp.float32) * (1.0 / c)

        if tm is None:
            tm = _pick_rows(width, nf)
        grid = (pl.cdiv(nf, tm),)                          # ragged last block is masked

        out = pl.pallas_call(
            functools.partial(_ln_rows_folded_kernel, eps=eps),
            out_shape=jax.ShapeDtypeStruct((nf, width), orig_dtype),
            grid_spec=pltpu.PrefetchScalarGridSpec(
                num_scalar_prefetch=0,
                grid=grid,
                in_specs=[
                    pl.BlockSpec((tm, width), lambda i: (i, 0)),
                    pl.BlockSpec((width, width), lambda i: (0, 0)),  # resident m
                    pl.BlockSpec((1, width), lambda i: (0, 0)),      # resident weight
                    pl.BlockSpec((1, width), lambda i: (0, 0)),      # resident bias
                ],
                out_specs=pl.BlockSpec((tm, width), lambda i: (i, 0)),
            ),
            compiler_params=pltpu.CompilerParams(
                dimension_semantics=("parallel",),
                vmem_limit_bytes=_VMEM_LIMIT),
        )(xf, mavg, wf, bf)
        out = out.reshape(n_pad, c)
        return out[:n] if n_pad != n else out

    # Un-folded path: c is a multiple of 128 (already lane-dense) or folding would
    # blow width past 512; plain XLU last-axis reduction.
    w2 = weight.astype(jnp.float32).reshape(1, c)
    b2 = bias.astype(jnp.float32).reshape(1, c)
    if tm is None:
        tm = _pick_rows(c, n)
    grid = (pl.cdiv(n, tm),)

    return pl.pallas_call(
        functools.partial(_ln_rows_plain_kernel, eps=eps),
        out_shape=jax.ShapeDtypeStruct((n, c), orig_dtype),
        grid_spec=pltpu.PrefetchScalarGridSpec(
            num_scalar_prefetch=0,
            grid=grid,
            in_specs=[
                pl.BlockSpec((tm, c), lambda i: (i, 0)),
                pl.BlockSpec((1, c), lambda i: (0, 0)),
                pl.BlockSpec((1, c), lambda i: (0, 0)),
            ],
            out_specs=pl.BlockSpec((tm, c), lambda i: (i, 0)),
        ),
        compiler_params=pltpu.CompilerParams(
            dimension_semantics=("parallel",),
            vmem_limit_bytes=_VMEM_LIMIT),
    )(x2d, w2, b2)


# ----------------------------------------------------------------------------
# channels_first kernel: x viewed as (B, C, S); reduce over axis=1 (tiny C axis),
# spatial S stays the dense 128-aligned lane axis.  Batch-tiled blocks (bt, C, ts)
# so each grid step moves a few MiB of real data.  No transposes anywhere.
# ----------------------------------------------------------------------------
def _ln_cfirst_kernel(x_ref, w_ref, b_ref, o_ref, *, eps):
    x = x_ref[...].astype(jnp.float32)                     # (BT, C, TS)
    mean = jnp.mean(x, axis=1, keepdims=True)              # (BT, 1, TS)
    xc = x - mean
    var = jnp.mean(xc * xc, axis=1, keepdims=True)
    inv = lax.rsqrt(var + eps)
    y = xc * inv * w_ref[...] + b_ref[...]                 # (1, C, 1) broadcasts
    o_ref[...] = y.astype(o_ref.dtype)


def _layernorm_channels_first(x, weight, bias, eps, bt=None, ts=None):
    """x: (B, C, *spatial), normalized over axis=1."""
    b, c = x.shape[0], x.shape[1]
    s = 1
    for d in x.shape[2:]:
        s *= d
    x3 = x.reshape(b, c, s)                                # free reshape, no transpose
    w3 = weight.astype(jnp.float32).reshape(1, c, 1)
    b3 = bias.astype(jnp.float32).reshape(1, c, 1)

    auto_bt, auto_ts = _pick_cfirst_tiles(b, c, s)
    if bt is None:
        bt = auto_bt
    if ts is None:
        ts = auto_ts
    grid = (b // bt, pl.cdiv(s, ts))                       # bt divides b; ragged ts masked

    out = pl.pallas_call(
        functools.partial(_ln_cfirst_kernel, eps=eps),
        out_shape=jax.ShapeDtypeStruct((b, c, s), x.dtype),
        grid_spec=pltpu.PrefetchScalarGridSpec(
            num_scalar_prefetch=0,
            grid=grid,
            in_specs=[
                pl.BlockSpec((bt, c, ts), lambda i, j: (i, 0, j)),
                pl.BlockSpec((1, c, 1), lambda i, j: (0, 0, 0)),   # resident
                pl.BlockSpec((1, c, 1), lambda i, j: (0, 0, 0)),
            ],
            out_specs=pl.BlockSpec((bt, c, ts), lambda i, j: (i, 0, j)),
        ),
        compiler_params=pltpu.CompilerParams(
            dimension_semantics=("parallel", "parallel"),
            vmem_limit_bytes=_VMEM_LIMIT),
    )(x3, w3, b3)
    return out.reshape(x.shape)


# ----------------------------------------------------------------------------
# Module-equivalent wrapper
# ----------------------------------------------------------------------------
class PallasLayerNorm:
    """Mirrors pangteen/network/mednext LayerNorm forward semantics."""

    def __init__(self, normalized_shape, eps=1e-05, data_format="channels_last"):
        if data_format not in ["channels_last", "channels_first"]:
            raise NotImplementedError
        self.weight = jnp.ones((normalized_shape,), dtype=jnp.float32)
        self.bias = jnp.zeros((normalized_shape,), dtype=jnp.float32)
        self.eps = eps
        self.data_format = data_format
        self.normalized_shape = (normalized_shape,)

    def __call__(self, x):
        c = self.normalized_shape[0]
        if self.data_format == "channels_last":
            assert x.shape[-1] == c
            x2d = x.reshape(-1, c)
            y2d = _layernorm_channels_last(x2d, self.weight, self.bias, self.eps)
            return y2d.reshape(x.shape)
        else:  # channels_first: x is (B, C, *spatial)  (MedNeXt: B, C, D, H, W)
            assert x.shape[1] == c
            return _layernorm_channels_first(x, self.weight, self.bias, self.eps)


# ----------------------------------------------------------------------------
# Pure-JAX references (for correctness check)
# ----------------------------------------------------------------------------
def _ref_channels_last(x, w, b, eps):
    mean = jnp.mean(x, axis=-1, keepdims=True)
    var = jnp.mean((x - mean) ** 2, axis=-1, keepdims=True)
    return (x - mean) / jnp.sqrt(var + eps) * w + b


def _ref_channels_first(x, w, b, eps):
    u = jnp.mean(x, axis=1, keepdims=True)
    s = jnp.mean((x - u) ** 2, axis=1, keepdims=True)
    xn = (x - u) / jnp.sqrt(s + eps)
    shape = (1, x.shape[1]) + (1,) * (x.ndim - 2)
    return w.reshape(shape) * xn + b.reshape(shape)


if __name__ == "__main__":
    key = jax.random.PRNGKey(0)
    k1, k2, k3, k4, k5, kw, kb = jax.random.split(key, 7)

    # 1) channels_last: (B, H, W, C) with C = 32 (lane-folded g = 4)
    x_cl = jax.random.normal(k1, (2, 8, 8, 32), dtype=jnp.float32)
    ln_cl = PallasLayerNorm(32, eps=1e-05, data_format="channels_last")
    ln_cl.weight = jax.random.normal(kw, (32,), dtype=jnp.float32)
    ln_cl.bias = jax.random.normal(kb, (32,), dtype=jnp.float32)
    y_cl = jax.block_until_ready(ln_cl(x_cl))
    y_cl_ref = _ref_channels_last(x_cl, ln_cl.weight, ln_cl.bias, ln_cl.eps)
    assert jnp.allclose(y_cl, y_cl_ref, atol=2e-5, rtol=2e-5)

    # 2) channels_first: (B, C, D, H, W) with C = 4 (transpose-free, batch-tiled)
    x_cf = jax.random.normal(k2, (2, 4, 8, 8, 8), dtype=jnp.float32)
    ln_cf = PallasLayerNorm(4, eps=1e-05, data_format="channels_first")
    ln_cf.weight = jax.random.normal(kw, (4,), dtype=jnp.float32)
    ln_cf.bias = jax.random.normal(kb, (4,), dtype=jnp.float32)
    y_cf = jax.block_until_ready(ln_cf(x_cf))
    y_cf_ref = _ref_channels_first(x_cf, ln_cf.weight, ln_cf.bias, ln_cf.eps)
    assert jnp.allclose(y_cf, y_cf_ref, atol=2e-5, rtol=2e-5)

    # 3) forced small row tile -> ragged last block path (N=200 rows, folded to 50, tm=16)
    x_rg = jax.random.normal(k3, (200, 32), dtype=jnp.float32)
    w_rg = jax.random.normal(kw, (32,), dtype=jnp.float32)
    b_rg = jax.random.normal(kb, (32,), dtype=jnp.float32)
    y_rg = jax.block_until_ready(
        _layernorm_channels_last(x_rg, w_rg, b_rg, 1e-05, tm=16))
    y_rg_ref = _ref_channels_last(x_rg, w_rg, b_rg, 1e-05)
    assert jnp.allclose(y_rg, y_rg_ref, atol=2e-5, rtol=2e-5)

    # 4) N not divisible by fold factor -> pad+slice path (N=201, g=4)
    x_pd = jax.random.normal(k4, (201, 32), dtype=jnp.float32)
    y_pd = jax.block_until_ready(
        _layernorm_channels_last(x_pd, w_rg, b_rg, 1e-05))
    y_pd_ref = _ref_channels_last(x_pd, w_rg, b_rg, 1e-05)
    assert jnp.allclose(y_pd, y_pd_ref, atol=2e-5, rtol=2e-5)

    # 5) C = 48 -> generalized lcm fold (g=8, width=384, lane-dense)
    x_48 = jax.random.normal(k5, (3, 16, 48), dtype=jnp.float32)
    ln_48 = PallasLayerNorm(48, eps=1e-05, data_format="channels_last")
    ln_48.weight = jax.random.normal(kw, (48,), dtype=jnp.float32)
    ln_48.bias = jax.random.normal(kb, (48,), dtype=jnp.float32)
    y_48 = jax.block_until_ready(ln_48(x_48))
    y_48_ref = _ref_channels_last(x_48, ln_48.weight, ln_48.bias, ln_48.eps)
    assert jnp.allclose(y_48, y_48_ref, atol=2e-5, rtol=2e-5)

    # 6) C = 128 -> un-folded plain-reduction kernel
    x_128 = jax.random.normal(k1, (4, 6, 128), dtype=jnp.float32)
    ln_128 = PallasLayerNorm(128, eps=1e-05, data_format="channels_last")
    y_128 = jax.block_until_ready(ln_128(x_128))
    y_128_ref = _ref_channels_last(x_128, ln_128.weight, ln_128.bias, ln_128.eps)
    assert jnp.allclose(y_128, y_128_ref, atol=2e-5, rtol=2e-5)

    print("KERNEL_OK")
</pallas_src>

<mosaic_0001>
module attributes {stable_mosaic.version = 11 : i64} {
  func.func @_ln_rows_folded_kernel(%arg0: i32, %arg1: memref<16x128xf32, #tpu.memory_space<vmem>>, %arg2: memref<128x128xf32, #tpu.memory_space<vmem>>, %arg3: memref<1x128xf32, #tpu.memory_space<vmem>>, %arg4: memref<1x128xf32, #tpu.memory_space<vmem>>, %arg5: memref<16x128xf32, #tpu.memory_space<vmem>>) attributes {dimension_semantics = [#tpu.dimension_semantics<parallel>], iteration_bounds = array<i64: 2>, scalar_prefetch = 0 : i64, scratch_operands = 0 : i64, tpu.core_type = #tpu.core_type<tc>, window_params = [{transform_indices = @transform_0, window_bounds = array<i64: 16, 128>}, {pipeline_mode = #tpu.pipeline_mode<synchronous>, transform_indices = @transform_1, window_bounds = array<i64: 128, 128>}, {pipeline_mode = #tpu.pipeline_mode<synchronous>, transform_indices = @transform_2, window_bounds = array<i64: 1, 128>}, {pipeline_mode = #tpu.pipeline_mode<synchronous>, transform_indices = @transform_3, window_bounds = array<i64: 1, 128>}, {transform_indices = @transform_4, window_bounds = array<i64: 16, 128>}]} {
    %c0 = arith.constant 0 : index
    %c0_0 = arith.constant 0 : index
    %0 = vector.load %arg1[%c0, %c0_0] : memref<16x128xf32, #tpu.memory_space<vmem>>, vector<16x128xf32>
    %c0_1 = arith.constant 0 : index
    %c0_2 = arith.constant 0 : index
    %1 = vector.load %arg2[%c0_1, %c0_2] : memref<128x128xf32, #tpu.memory_space<vmem>>, vector<128x128xf32>
    %cst = arith.constant dense<0.000000e+00> : vector<16x128xf32>
    %2 = tpu.matmul %0, %1, %cst {dimension_numbers = #tpu.dot_dimension_numbers<[1], [0], [0], [1], [0, 0, 1, 1], [], []>} : vector<16x128xf32>, vector<128x128xf32>, vector<16x128xf32> -> vector<16x128xf32>
    %3 = arith.mulf %0, %0 : vector<16x128xf32>
    %cst_3 = arith.constant dense<0.000000e+00> : vector<16x128xf32>
    %4 = tpu.matmul %3, %1, %cst_3 {dimension_numbers = #tpu.dot_dimension_numbers<[1], [0], [0], [1], [0, 0, 1, 1], [], []>} : vector<16x128xf32>, vector<128x128xf32>, vector<16x128xf32> -> vector<16x128xf32>
    %5 = arith.mulf %2, %2 : vector<16x128xf32>
    %6 = arith.subf %4, %5 : vector<16x128xf32>
    %cst_4 = arith.constant 0.000000e+00 : f32
    %7 = vector.broadcast %cst_4 : f32 to vector<16x128xf32>
    %8 = arith.maximumf %6, %7 : vector<16x128xf32>
    %cst_5 = arith.constant 9.99999974E-6 : f32
    %9 = vector.broadcast %cst_5 : f32 to vector<16x128xf32>
    %10 = arith.addf %8, %9 : vector<16x128xf32>
    %11 = math.rsqrt %10 : vector<16x128xf32>
    %12 = arith.subf %0, %2 : vector<16x128xf32>
    %13 = arith.mulf %12, %11 : vector<16x128xf32>
    %c0_6 = arith.constant 0 : index
    %c0_7 = arith.constant 0 : index
    %14 = vector.load %arg3[%c0_6, %c0_7] : memref<1x128xf32, #tpu.memory_space<vmem>>, vector<1x128xf32>
    %15 = vector.broadcast %14 : vector<1x128xf32> to vector<16x128xf32>
    %16 = arith.mulf %13, %15 : vector<16x128xf32>
    %c0_8 = arith.constant 0 : index
    %c0_9 = arith.constant 0 : index
    %17 = vector.load %arg4[%c0_8, %c0_9] : memref<1x128xf32, #tpu.memory_space<vmem>>, vector<1x128xf32>
    %18 = vector.broadcast %17 : vector<1x128xf32> to vector<16x128xf32>
    %19 = arith.addf %16, %18 : vector<16x128xf32>
    %c0_10 = arith.constant 0 : index
    %c0_11 = arith.constant 0 : index
    %20 = vector.load %arg5[%c0_10, %c0_11] : memref<16x128xf32, #tpu.memory_space<vmem>>, vector<16x128xf32>
    tpu.vector_store %arg5[%c0_10, %c0_11], %19 {strides = array<i32>} : memref<16x128xf32, #tpu.memory_space<vmem>>, vector<16x128xf32>,
    return
  }
  func.func @transform_0(%arg0: i32) -> (i32, i32) {
    %c0_i32 = arith.constant 0 : i32
    %c0_i32_0 = arith.constant 0 : i32
    return %arg0, %c0_i32 : i32, i32
  }
  func.func @transform_1(%arg0: i32) -> (i32, i32) {
    %c0_i32 = arith.constant 0 : i32
    %c0_i32_0 = arith.constant 0 : i32
    %c0_i32_1 = arith.constant 0 : i32
    return %c0_i32, %c0_i32_0 : i32, i32
  }
  func.func @transform_2(%arg0: i32) -> (i32, i32) {
    %c0_i32 = arith.constant 0 : i32
    %c0_i32_0 = arith.constant 0 : i32
    %c0_i32_1 = arith.constant 0 : i32
    return %c0_i32, %c0_i32_0 : i32, i32
  }
  func.func @transform_3(%arg0: i32) -> (i32, i32) {
    %c0_i32 = arith.constant 0 : i32
    %c0_i32_0 = arith.constant 0 : i32
    %c0_i32_1 = arith.constant 0 : i32
    return %c0_i32, %c0_i32_0 : i32, i32
  }
  func.func @transform_4(%arg0: i32) -> (i32, i32) {
    %c0_i32 = arith.constant 0 : i32
    %c0_i32_0 = arith.constant 0 : i32
    return %arg0, %c0_i32 : i32, i32
  }
}

</mosaic_0001>

<llo_original>
// kernel: tpu_custom_call.1
$region0: #{tpu_custom_call.1}
  #allocation0 [shape = 'u32[]', space=smem, size = 0x4, offset = 0x4, fixed_abs, tag = 'smem constant byte address 0x4 - core index']
  #allocation1 [shape = 'u32[144,128]{1,0:T(1,128)}', space=vmem, size = 0x12000, scoped, tag = 'internal scratch']
  %s0 = inlined_call_operand.hbm [shape: f32[32,128], index: 0, kind: input, shape index: {}]
  %s1 = inlined_call_operand.hbm [shape: f32[128,128], index: 1, kind: input, shape index: {}]
  %s2 = inlined_call_operand.vmem [shape: f32[1,128], index: 2, kind: input, shape index: {}]
  %s3 = inlined_call_operand.vmem [shape: f32[1,128], index: 3, kind: input, shape index: {}]
  %s4 = inlined_call_operand.hbm [shape: f32[32,128], index: 4, kind: output, shape index: {}]
  %s5 = sld [smem:[#allocation0]]
  $region57: #{tpu_custom_call.1} parent=0
    _
  %s7 = ssub.s32 1, %s5
  %s8 = scalar_select 0, %s7, %s5
  $region1: #{tpu_custom_call.1} parent=0
    #allocation2 [shape = 'u8[16384]{0}', space=vmem, size = 0x4000, scoped, tag = 'input window, operand 0']
    #allocation3 [shape = 's32[2]{0}', space=sflag, size = 0x8, scoped, tag = 'scoped memory for tpu_custom_call.1']
    #allocation4 [shape = 's32[2]{0}', space=sflag, size = 0x8, scoped, tag = 'scoped memory for tpu_custom_call.1']
    #allocation5 [shape = 'u8[65536]{0}', space=vmem, size = 0x10000, scoped, tag = 'input window, operand 1, single buffered']
    #allocation6 [shape = 's32[1]{0}', space=sflag, size = 0x4, scoped, tag = 'scoped memory for tpu_custom_call.1']
    #allocation7 [shape = 'u8[16384]{0}', space=vmem, size = 0x4000, scoped, tag = 'output window, operand 0']
    %9 = vsyncpa [#allocation3], 0
    %s10 = scalar_lea.sflag [#allocation3], 1
    %11 = vsyncpa %s10, 0
    %12 = vsyncpa [#allocation6], 0
    %13 = vsyncpa [#allocation4], 0
    %s14 = scalar_lea.sflag [#allocation4], 1
    %15 = vsyncpa %s14, 0
    loop: start=0, step=1, limit=4
    $region2: #{tpu_custom_call.1} parent=1 // loop_pre_header
      _
    $region3: #{tpu_custom_call.1} parent=1 // loop_header
      %s17 = sphi 0, %s21
      %p18 = scmp.ge.s32.totalorder %s17, 4
      %s27 = sphi 0, %s29
      %s30 = sphi 0, %s27
      %s31 = sphi 0, %s30
      %s47 = sphi 0, %s31
      %s51 = sphi 0, %s51
      %s53 = sphi 0, %s51
      %s54 = sphi 0, %s53
      %s68 = sphi 0, %s54
      %s72 = sphi 0, %s72
      %s74 = sphi 0, %s72
      %s75 = sphi 0, %s74
      %s89 = sphi 0, %s75
      %s93 = sphi 0, %s93
      %s95 = sphi 0, %s93
      %s96 = sphi 0, %s95
      %s110 = sphi 0, %s96
      %s116 = sphi 0, %s118
      %s119 = sphi 0, %s116
      %s120 = sphi 0, %s119
      %s136 = sphi 0, %s120
    $region4: #{tpu_custom_call.1} parent=1 // loop_header_branch
      %20 = sbr.rel (%p18) target = $region8
    $region5: #{tpu_custom_call.1} parent=1 // loop_body
      %s22 = ssub.s32 %s17, 1
      %s23 = ssub.s32 %s17, 2
      %s24 = sadd.s32 %s17, 1
      %s25 = ssub.s32 %s17, %s24
      %p26 = scmp.eq.s32.totalorder %s25, 0
      %s28 = sadd.s32 %s27, 1
      %s29 = scalar_select %p26, %s27, %s28
      %p32 = pneg %p26
      %p33 = scmp.eq.s32.totalorder %s17, 1
      %p34 = por %p32, %p33
      %p35 = scmp.ne.s32.totalorder %s27, %s30
      %p36 = scmp.eq.s32.totalorder %s17, 0
      %p37 = por %p35, %p36
      %p38 = scmp.ne.s32.totalorder %s27, %s30
      %p39 = scmp.eq.s32.totalorder %s22, 1
      %p40 = por %p38, %p39
      %p41 = scmp.ne.s32.totalorder %s30, %s31
      %p42 = scmp.eq.s32.totalorder %s22, 0
      %p43 = por %p41, %p42
      %p44 = scmp.ne.s32.totalorder %s30, %s31
      %p45 = scmp.eq.s32.totalorder %s23, 1
      %p46 = por %p44, %p45
      %p48 = scmp.ne.s32.totalorder %s31, %s47
      %p49 = scmp.eq.s32.totalorder %s23, 0
      %p50 = por %p48, %p49
      %s52 = sadd.s32 %s51, 1
      %p55 = scmp.eq.s32.totalorder %s17, 1
      %p56 = scmp.ne.s32.totalorder %s51, %s53
      %p57 = scmp.eq.s32.totalorder %s17, 0
      %p58 = por %p56, %p57
      %p59 = scmp.ne.s32.totalorder %s51, %s53
      %p60 = scmp.eq.s32.totalorder %s22, 1
      %p61 = por %p59, %p60
      %p62 = scmp.ne.s32.totalorder %s53, %s54
      %p63 = scmp.eq.s32.totalorder %s22, 0
      %p64 = por %p62, %p63
      %p65 = scmp.ne.s32.totalorder %s53, %s54
      %p66 = scmp.eq.s32.totalorder %s23, 1
      %p67 = por %p65, %p66
      %p69 = scmp.ne.s32.totalorder %s54, %s68
      %p70 = scmp.eq.s32.totalorder %s23, 0
      %p71 = por %p69, %p70
      %s73 = sadd.s32 %s72, 1
      %p76 = scmp.eq.s32.totalorder %s17, 1
      %p77 = scmp.ne.s32.totalorder %s72, %s74
      %p78 = scmp.eq.s32.totalorder %s17, 0
      %p79 = por %p77, %p78
      %p80 = scmp.ne.s32.totalorder %s72, %s74
      %p81 = scmp.eq.s32.totalorder %s22, 1
      %p82 = por %p80, %p81
      %p83 = scmp.ne.s32.totalorder %s74, %s75
      %p84 = scmp.eq.s32.totalorder %s22, 0
      %p85 = por %p83, %p84
      %p86 = scmp.ne.s32.totalorder %s74, %s75
      %p87 = scmp.eq.s32.totalorder %s23, 1
      %p88 = por %p86, %p87
      %p90 = scmp.ne.s32.totalorder %s75, %s89
      %p91 = scmp.eq.s32.totalorder %s23, 0
      %p92 = por %p90, %p91
      %s94 = sadd.s32 %s93, 1
      %p97 = scmp.eq.s32.totalorder %s17, 1
      %p98 = scmp.ne.s32.totalorder %s93, %s95
      %p99 = scmp.eq.s32.totalorder %s17, 0
      %p100 = por %p98, %p99
      %p101 = scmp.ne.s32.totalorder %s93, %s95
      %p102 = scmp.eq.s32.totalorder %s22, 1
      %p103 = por %p101, %p102
      %p104 = scmp.ne.s32.totalorder %s95, %s96
      %p105 = scmp.eq.s32.totalorder %s22, 0
      %p106 = por %p104, %p105
      %p107 = scmp.ne.s32.totalorder %s95, %s96
      %p108 = scmp.eq.s32.totalorder %s23, 1
      %p109 = por %p107, %p108
      %p111 = scmp.ne.s32.totalorder %s96, %s110
      %p112 = scmp.eq.s32.totalorder %s23, 0
      %p113 = por %p111, %p112
      %s114 = ssub.s32 %s17, %s24
      %p115 = scmp.eq.s32.totalorder %s114, 0
      %s117 = sadd.s32 %s116, 1
      %s118 = scalar_select %p115, %s116, %s117
      %p121 = pneg %p115
      %p122 = scmp.eq.s32.totalorder %s17, 1
      %p123 = por %p121, %p122
      %p124 = scmp.ne.s32.totalorder %s116, %s119
      %p125 = scmp.eq.s32.totalorder %s17, 0
      %p126 = por %p124, %p125
      %p127 = scmp.ne.s32.totalorder %s116, %s119
      %p128 = scmp.eq.s32.totalorder %s22, 1
      %p129 = por %p127, %p128
      %p130 = scmp.ne.s32.totalorder %s119, %s120
      %p131 = scmp.eq.s32.totalorder %s22, 0
      %p132 = por %p130, %p131
      %p133 = scmp.ne.s32.totalorder %s119, %s120
      %p134 = scmp.eq.s32.totalorder %s23, 1
      %p135 = por %p133, %p134
      %p137 = scmp.ne.s32.totalorder %s120, %s136
      %p138 = scmp.eq.s32.totalorder %s23, 0
      %p139 = por %p137, %p138
      %p140 = scmp.le.s32.totalorder 1, %s17
      %p141 = scmp.lt.s32.totalorder %s17, 3
      %p142 = pnand %p140, %p141
      %p143 = pneg %p142
      // Predicated region
      $region9: #{tpu_custom_call.1} parent=5 // pred_check
        _
      $region10: #{tpu_custom_call.1} parent=5 // pred_check_branch
        %145 = sbr.rel (%p142) target = $region12
      $region11: #{tpu_custom_call.1} parent=5 // pred_region
        %s146 = ssub.s32 %s17, 1
        // Predicated region
        $region13: #{tpu_custom_call.1} parent=11 // pred_check
          %p147 = pneg %p64
        $region14: #{tpu_custom_call.1} parent=11 // pred_check_branch
          %149 = sbr.rel (%p147) target = $region16
        $region15: #{tpu_custom_call.1} parent=11 // pred_region
          %s151 = ssub.s32 2048, 2048
          %152 = vsyncadd [#allocation6], %s151
          %s153 = sshll.u32 [#allocation5], 4
          %s154 = int_to_ptr.vmem [resolvable:$true] %s153
          %159 = dma.hbm_to_vmem [thread:$0]  %s1, 2048, %s154, [#allocation6], 128, 128, 8
        $region16: #{tpu_custom_call.1} parent=11 // pred_fallthru
          _
        // Predicated region
        $region17: #{tpu_custom_call.1} parent=11 // pred_check
          %p160 = pneg %p85
        $region18: #{tpu_custom_call.1} parent=11 // pred_check_branch
          %162 = sbr.rel (%p160) target = $region20
        $region19: #{tpu_custom_call.1} parent=11 // pred_region
          _
        $region20: #{tpu_custom_call.1} parent=11 // pred_fallthru
          _
        // Predicated region
        $region21: #{tpu_custom_call.1} parent=11 // pred_check
          %p163 = pneg %p106
        $region22: #{tpu_custom_call.1} parent=11 // pred_check_branch
          %165 = sbr.rel (%p163) target = $region24
        $region23: #{tpu_custom_call.1} parent=11 // pred_region
          _
        $region24: #{tpu_custom_call.1} parent=11 // pred_fallthru
          _
      $region12: #{tpu_custom_call.1} parent=5 // pred_fallthru
        _
      %p166 = scmp.lt.s32.totalorder %s17, 2
      // Predicated region
      $region25: #{tpu_custom_call.1} parent=5 // pred_check
        %p167 = pneg %p166
      $region26: #{tpu_custom_call.1} parent=5 // pred_check_branch
        %169 = sbr.rel (%p167) target = $region28
      $region27: #{tpu_custom_call.1} parent=5 // pred_region
        // Predicated region
        $region29: #{tpu_custom_call.1} parent=27 // pred_check
          %p170 = pneg %p37
        $region30: #{tpu_custom_call.1} parent=27 // pred_check_branch
          %172 = sbr.rel (%p170) target = $region32
        $region31: #{tpu_custom_call.1} parent=27 // pred_region
          %s173 = sand.u32 %s27, 1
          %s174 = scalar_lea.sflag [#allocation3], %s173
          %s175 = sand.u32 %s27, 1
          %s176 = smul.addr %s175, 16
          %s177 = scalar_lea.vmem [#allocation2], %s176
          %s178 = smul.u32 2, %s17
          %s180 = ssub.s32 256, 256
          %181 = vsyncadd %s174, %s180
          %s182 = smul.addr %s178, 128
          %s183 = scalar_lea.hbm %s0, %s182
          %s184 = sshll.u32 %s177, 4
          %s185 = int_to_ptr.vmem [resolvable:$true] %s184
          %190 = dma.hbm_to_vmem [thread:$0]  %s183, 256, %s185, %s174, 128, 128, 8
        $region32: #{tpu_custom_call.1} parent=27 // pred_fallthru
          _
      $region28: #{tpu_custom_call.1} parent=5 // pred_fallthru
        _
      %p191 = scmp.le.s32.totalorder 1, %s17
      %p192 = scmp.lt.s32.totalorder %s17, 3
      %p193 = pnand %p191, %p192
      %p194 = pneg %p193
      // Predicated region
      $region33: #{tpu_custom_call.1} parent=5 // pred_check
        _
      $region34: #{tpu_custom_call.1} parent=5 // pred_check_branch
        %196 = sbr.rel (%p193) target = $region36
      $region35: #{tpu_custom_call.1} parent=5 // pred_region
        %s197 = ssub.s32 %s17, 1
        %s198 = sand.u32 %s30, 1
        %s199 = scalar_lea.sflag [#allocation3], %s198
        %s200 = sand.u32 %s30, 1
        %s201 = smul.addr %s200, 16
        %s202 = scalar_lea.vmem [#allocation2], %s201
        // Predicated region
        $region37: #{tpu_custom_call.1} parent=35 // pred_check
          %p203 = pneg %p43
        $region38: #{tpu_custom_call.1} parent=35 // pred_check_branch
          %205 = sbr.rel (%p203) target = $region40
        $region39: #{tpu_custom_call.1} parent=35 // pred_region
          %206 = dma.done %s199, 256
        $region40: #{tpu_custom_call.1} parent=35 // pred_fallthru
          _
        // Predicated region
        $region41: #{tpu_custom_call.1} parent=35 // pred_check
          %p207 = pneg %p64
        $region42: #{tpu_custom_call.1} parent=35 // pred_check_branch
          %209 = sbr.rel (%p207) target = $region44
        $region43: #{tpu_custom_call.1} parent=35 // pred_region
          %210 = dma.done [#allocation6], 2048
        $region44: #{tpu_custom_call.1} parent=35 // pred_fallthru
          _
        %s211 = sand.u32 %s30, 1
        %s212 = scalar_lea.sflag [#allocation3], %s211
        %s213 = sand.u32 %s30, 1
        %s214 = smul.addr %s213, 16
        %s215 = scalar_lea.vmem [#allocation2], %s214
        %p216 = pneg %p43
        %p217 = pneg %p40
        %p218 = pneg %p64
        %p219 = pneg %p61
        %p220 = pneg %p85
        %p221 = pneg %p82
        %p222 = pneg %p106
        %p223 = pneg %p103
        %p224 = pneg %p132
        %p225 = pneg %p129
        %s226 = sand.u32 %s119, 1
        %s227 = scalar_lea.sflag [#allocation4], %s226
        %s228 = sand.u32 %s119, 1
        %s229 = smul.addr %s228, 16
        %s230 = scalar_lea.vmem [#allocation7], %s229
        %s231 = smul.u32 2, %s22
        %s232 = smul.u32 2, %s22
        %v233 = vld [vmem:[%s202] sm:$0xff]
        %v234 = vld [vmem:[%s202 + $0x8] sm:$0xff]
        %v235 = vld [vmem:[#allocation5] sm:$0xff]
        %v236 = vld [vmem:[#allocation5 + $0x8] sm:$0xff]
        %v237 = vld [vmem:[#allocation5 + $0x10] sm:$0xff]
        %v238 = vld [vmem:[#allocation5 + $0x18] sm:$0xff]
        %v239 = vld [vmem:[#allocation5 + $0x20] sm:$0xff]
        %v240 = vld [vmem:[#allocation5 + $0x28] sm:$0xff]
        %v241 = vld [vmem:[#allocation5 + $0x30] sm:$0xff]
        %v242 = vld [vmem:[#allocation5 + $0x38] sm:$0xff]
        %v243 = vld [vmem:[#allocation5 + $0x40] sm:$0xff]
        %v244 = vld [vmem:[#allocation5 + $0x48] sm:$0xff]
        %v245 = vld [vmem:[#allocation5 + $0x50] sm:$0xff]
        %v246 = vld [vmem:[#allocation5 + $0x58] sm:$0xff]
        %v247 = vld [vmem:[#allocation5 + $0x60] sm:$0xff]
        %v248 = vld [vmem:[#allocation5 + $0x68] sm:$0xff]
        %v249 = vld [vmem:[#allocation5 + $0x70] sm:$0xff]
        %v250 = vld [vmem:[#allocation5 + $0x78] sm:$0xff]
        %251 = vmatprep.subr.mxu0 0.0
        %252 = vmatpush1.msra.mxu0 %v235
        %253 = vmatprep.subr.mxu0 0.0
        %254 = vmatpush1.msra.mxu0 %v236
        %255 = vmatprep.subr.mxu0 0.0
        %256 = vmatpush1.msra.mxu0 %v237
        %257 = vmatprep.subr.mxu0 0.0
        %258 = vmatpush1.msra.mxu0 %v238
        %259 = vmatprep.subr.mxu0 0.0
        %260 = vmatpush1.msra.mxu0 %v239
        %261 = vmatprep.subr.mxu0 0.0
        %262 = vmatpush1.msra.mxu0 %v240
        %263 = vmatprep.subr.mxu0 0.0
        %264 = vmatpush1.msra.mxu0 %v241
        %265 = vmatprep.subr.mxu0 0.0
        %266 = vmatpush1.msra.mxu0 %v242
        %267 = vmatprep.subr.mxu0 0.0
        %268 = vmatpush1.msra.mxu0 %v243
        %269 = vmatprep.subr.mxu0 0.0
        %270 = vmatpush1.msra.mxu0 %v244
        %271 = vmatprep.subr.mxu0 0.0
        %272 = vmatpush1.msra.mxu0 %v245
        %273 = vmatprep.subr.mxu0 0.0
        %274 = vmatpush1.msra.mxu0 %v246
        %275 = vmatprep.subr.mxu0 0.0
        %276 = vmatpush1.msra.mxu0 %v247
        %277 = vmatprep.subr.mxu0 0.0
        %278 = vmatpush1.msra.mxu0 %v248
        %279 = vmatprep.subr.mxu0 0.0
        %280 = vmatpush1.msra.mxu0 %v249
        %281 = vmatprep.subr.mxu0 0.0
        %282 = vmatpush1.msra.mxu0 %v250
        %283 = vmatprep.subr.mxu0 0.0
        %284 = vmatpush1.msra.mxu0 0.0
        %285 = vmatprep.subr.mxu0 0.0
        %286 = vmatpush1.msra.mxu0 0.0
        %287 = vmatprep.subr.mxu0 0.0
        %288 = vmatpush1.msra.mxu0 0.0
        %289 = vmatprep.subr.mxu0 0.0
        %290 = vmatpush1.msra.mxu0 0.0
        %291 = vmatprep.subr.mxu0 0.0
        %292 = vmatpush1.msra.mxu0 0.0
        %293 = vmatprep.subr.mxu0 0.0
        %294 = vmatpush1.msra.mxu0 0.0
        %295 = vmatprep.subr.mxu0 0.0
        %296 = vmatpush1.msra.mxu0 0.0
        %297 = vmatprep.subr.mxu0 0.0
        %298 = vmatpush1.msra.mxu0 0.0
        %299 = vmatprep.subr.mxu0 0.0
        %300 = vmatpush1.msra.mxu0 0.0
        %301 = vmatprep.subr.mxu0 0.0
        %302 = vmatpush1.msra.mxu0 0.0
        %303 = vmatprep.subr.mxu0 0.0
        %304 = vmatpush1.msra.mxu0 0.0
        %305 = vmatprep.subr.mxu0 0.0
        %306 = vmatpush1.msra.mxu0 0.0
        %307 = vmatprep.subr.mxu0 0.0
        %308 = vmatpush1.msra.mxu0 0.0
        %309 = vmatprep.subr.mxu0 0.0
        %310 = vmatpush1.msra.mxu0 0.0
        %311 = vmatprep.subr.mxu0 0.0
        %312 = vmatpush1.msra.mxu0 0.0
        %313 = vmatprep.subr.mxu0 0.0
        %314 = vmatpush1.msra.mxu0 0.0
        %315 = vmatprep.mubr.f32.mxu0 0.0
        %316 = vmatmul.mubr.f32.gmra.mrb[0].mxu0 %v233
        %v317 = vpop.f32.mrb[0].mxu0
        %v318 = vadd.f32 0.0, %v317
        %v319 = vpop.f32.mrb[0].mxu0
        %320 = vmatprep.mubr.f32.mxu0 0.0
        %321 = vmatmul.mubr.f32.gmra.mrb[0].mxu0 %v234
        %v322 = vpop.f32.mrb[0].mxu0
        %v323 = vadd.f32 0.0, %v322
        %v324 = vpop.f32.mrb[0].mxu0
        %325 = vdwg.mxu0
        %v326 = vmul.f32 %v233, %v233
        %v327 = vmul.f32 %v234, %v234
        %328 = vmatprep.subr.mxu0 0.0
        %329 = vmatpush1.msra.mxu0 %v235
        %330 = vmatprep.subr.mxu0 0.0
        %331 = vmatpush1.msra.mxu0 %v236
        %332 = vmatprep.subr.mxu0 0.0
        %333 = vmatpush1.msra.mxu0 %v237
        %334 = vmatprep.subr.mxu0 0.0
        %335 = vmatpush1.msra.mxu0 %v238
        %336 = vmatprep.subr.mxu0 0.0
        %337 = vmatpush1.msra.mxu0 %v239
        %338 = vmatprep.subr.mxu0 0.0
        %339 = vmatpush1.msra.mxu0 %v240
        %340 = vmatprep.subr.mxu0 0.0
        %341 = vmatpush1.msra.mxu0 %v241
        %342 = vmatprep.subr.mxu0 0.0
        %343 = vmatpush1.msra.mxu0 %v242
        %344 = vmatprep.subr.mxu0 0.0
        %345 = vmatpush1.msra.mxu0 %v243
        %346 = vmatprep.subr.mxu0 0.0
        %347 = vmatpush1.msra.mxu0 %v244
        %348 = vmatprep.subr.mxu0 0.0
        %349 = vmatpush1.msra.mxu0 %v245
        %350 = vmatprep.subr.mxu0 0.0
        %351 = vmatpush1.msra.mxu0 %v246
        %352 = vmatprep.subr.mxu0 0.0
        %353 = vmatpush1.msra.mxu0 %v247
        %354 = vmatprep.subr.mxu0 0.0
        %355 = vmatpush1.msra.mxu0 %v248
        %356 = vmatprep.subr.mxu0 0.0
        %357 = vmatpush1.msra.mxu0 %v249
        %358 = vmatprep.subr.mxu0 0.0
        %359 = vmatpush1.msra.mxu0 %v250
        %360 = vmatprep.subr.mxu0 0.0
        %361 = vmatpush1.msra.mxu0 0.0
        %362 = vmatprep.subr.mxu0 0.0
        %363 = vmatpush1.msra.mxu0 0.0
        %364 = vmatprep.subr.mxu0 0.0
        %365 = vmatpush1.msra.mxu0 0.0
        %366 = vmatprep.subr.mxu0 0.0
        %367 = vmatpush1.msra.mxu0 0.0
        %368 = vmatprep.subr.mxu0 0.0
        %369 = vmatpush1.msra.mxu0 0.0
        %370 = vmatprep.subr.mxu0 0.0
        %371 = vmatpush1.msra.mxu0 0.0
        %372 = vmatprep.subr.mxu0 0.0
        %373 = vmatpush1.msra.mxu0 0.0
        %374 = vmatprep.subr.mxu0 0.0
        %375 = vmatpush1.msra.mxu0 0.0
        %376 = vmatprep.subr.mxu0 0.0
        %377 = vmatpush1.msra.mxu0 0.0
        %378 = vmatprep.subr.mxu0 0.0
        %379 = vmatpush1.msra.mxu0 0.0
        %380 = vmatprep.subr.mxu0 0.0
        %381 = vmatpush1.msra.mxu0 0.0
        %382 = vmatprep.subr.mxu0 0.0
        %383 = vmatpush1.msra.mxu0 0.0
        %384 = vmatprep.subr.mxu0 0.0
        %385 = vmatpush1.msra.mxu0 0.0
        %386 = vmatprep.subr.mxu0 0.0
        %387 = vmatpush1.msra.mxu0 0.0
        %388 = vmatprep.subr.mxu0 0.0
        %389 = vmatpush1.msra.mxu0 0.0
        %390 = vmatprep.subr.mxu0 0.0
        %391 = vmatpush1.msra.mxu0 0.0
        %392 = vmatprep.mubr.f32.mxu0 0.0
        %393 = vmatmul.mubr.f32.gmra.mrb[0].mxu0 %v326
        %v394 = vpop.f32.mrb[0].mxu0
        %v395 = vadd.f32 0.0, %v394
        %v396 = vpop.f32.mrb[0].mxu0
        %397 = vmatprep.mubr.f32.mxu0 0.0
        %398 = vmatmul.mubr.f32.gmra.mrb[0].mxu0 %v327
        %v399 = vpop.f32.mrb[0].mxu0
        %v400 = vadd.f32 0.0, %v399
        %v401 = vpop.f32.mrb[0].mxu0
        %402 = vdwg.mxu0
        %v403 = vmul.f32 %v318, %v318
        %v404 = vmul.f32 %v323, %v323
        %v405 = vsub.f32 %v395, %v403
        %v406 = vsub.f32 %v400, %v404
        %v407 = vmax.f32 %v405, 0.0
        %v408 = vmax.f32 %v406, 0.0
        %v409 = vadd.f32 %v407, 1e-05
        %v410 = vadd.f32 %v408, 1e-05
        %v411 = vrsqrt.pop %v409
        %v412 = vrsqrt.pop %v410
        %v413 = vsub.f32 %v233, %v318
        %v414 = vsub.f32 %v234, %v323
        %v415 = vmul.f32 %v413, %v411
        %v416 = vmul.f32 %v414, %v412
        %v417 = vld [vmem:[%s2] sm:$0x1]
        %v419 = vlaneseq
        %v420 = vshrl.u32 %v419, 7
        %v421 = vsub.s32 0, %v420
        %v422 = vrot.slane %v417, %v421
        %v424 = vmul.f32 %v415, %v422
        %v425 = vmul.f32 %v416, %v422
        %v426 = vld [vmem:[%s3] sm:$0x1]
        %v428 = vlaneseq
        %v429 = vshrl.u32 %v428, 7
        %v430 = vsub.s32 0, %v429
        %v431 = vrot.slane %v426, %v430
        %v433 = vadd.f32 %v424, %v431
        %v434 = vadd.f32 %v425, %v431
        %435 = vst [vmem:[%s230] sm:$0xff] %v433
        %436 = vst [vmem:[%s230 + $0x8] sm:$0xff] %v434
        %s437 = sand.u32 %s119, 1
        %s438 = scalar_lea.sflag [#allocation4], %s437
        %s439 = sand.u32 %s119, 1
        %s440 = smul.addr %s439, 16
        %s441 = scalar_lea.vmem [#allocation7], %s440
        // Predicated region
        $region45: #{tpu_custom_call.1} parent=35 // pred_check
          %p442 = pneg %p129
        $region46: #{tpu_custom_call.1} parent=35 // pred_check_branch
          %444 = sbr.rel (%p442) target = $region48
        $region47: #{tpu_custom_call.1} parent=35 // pred_region
          %s445 = smul.u32 2, %s22
          %s447 = ssub.s32 256, 256
          %448 = vsyncadd %s438, %s447
          %s449 = smul.addr %s445, 128
          %s450 = scalar_lea.hbm %s4, %s449
          %s451 = sshll.u32 %s441, 4
          %s452 = int_to_ptr.vmem [resolvable:$true] %s451
          %457 = dma.vmem_to_hbm [thread:$0]  %s452, 256, %s450, %s438, 128, 128, 8
        $region48: #{tpu_custom_call.1} parent=35 // pred_fallthru
          _
      $region36: #{tpu_custom_call.1} parent=5 // pred_fallthru
        _
      %p458 = scmp.le.s32.totalorder 2, %s17
      // Predicated region
      $region49: #{tpu_custom_call.1} parent=5 // pred_check
        %p459 = pneg %p458
      $region50: #{tpu_custom_call.1} parent=5 // pred_check_branch
        %461 = sbr.rel (%p459) target = $region52
      $region51: #{tpu_custom_call.1} parent=5 // pred_region
        %s462 = ssub.s32 %s17, 2
        // Predicated region
        $region53: #{tpu_custom_call.1} parent=51 // pred_check
          %p463 = pneg %p135
        $region54: #{tpu_custom_call.1} parent=51 // pred_check_branch
          %465 = sbr.rel (%p463) target = $region56
        $region55: #{tpu_custom_call.1} parent=51 // pred_region
          %s466 = sand.u32 %s120, 1
          %s467 = scalar_lea.sflag [#allocation4], %s466
          %s468 = sand.u32 %s120, 1
          %s469 = smul.addr %s468, 16
          %s470 = scalar_lea.vmem [#allocation7], %s469
          %471 = dma.done %s467, 256
        $region56: #{tpu_custom_call.1} parent=51 // pred_fallthru
          _
      $region52: #{tpu_custom_call.1} parent=5 // pred_fallthru
        _
    $region6: #{tpu_custom_call.1} parent=1 // loop_footer
      %s21 = sadd.s32 1, %s17
    $region7: #{tpu_custom_call.1} parent=1 // loop_footer_branch
      %16 = sbr.rel target = $region3
    $region8: #{tpu_custom_call.1} parent=1 // loop_exit
      _
    %472 = vsyncpa [#allocation3], 1
    %s473 = scalar_lea.sflag [#allocation3], 1
    %474 = vsyncpa %s473, 1
    %475 = vsyncpa [#allocation6], 1
    %476 = vsyncpa [#allocation4], 1
    %s477 = scalar_lea.sflag [#allocation4], 1
    %478 = vsyncpa %s477, 1

</llo_original>
